<compile_context>
chip_gen: v7x
topology: tpu7x:2x2x1
jax: 0.10.0
libtpu: 0.0.40
codegen_flags: <defaults>
</compile_context>

<pallas_src>
import functools

import jax
import jax.numpy as jnp
from jax.experimental import pallas as pl
from jax.experimental.pallas import tpu as pltpu

LANES = 128
SUBLANES = 8
MAX_TILE_ROWS = 8192      # 8192 x 128 x 4 B = 4 MiB per f32 input block
CHUNK_ROWS = 512          # inner-loop slab; bounds per-chunk temporaries


def _partial_sum_kernel(x_ref, t_ref, o_ref, acc_ref, *,
                        steps, rows, tile_rows, chunk_rows,
                        mask_threshold, need_mask):
    """Accumulates sum((x-t)^2), sum(|x-t|), sum(exp(x)) for one grid split."""
    i = pl.program_id(0)          # split index (one per TensorCore on v7x)
    j = pl.program_id(1)          # step within this split

    @pl.when(j == 0)
    def _init():
        acc_ref[...] = jnp.zeros_like(acc_ref)

    acc_rows = acc_ref.shape[1]
    nsub = chunk_rows // acc_rows
    num_chunks = tile_rows // chunk_rows
    blk = i * steps + j           # unclamped logical row-block index

    def fold_chunk(k, masked):
        if isinstance(k, int):
            r0 = k * chunk_rows
        else:
            r0 = pl.multiple_of(k * chunk_rows, chunk_rows)
        x = x_ref[pl.ds(r0, chunk_rows), :].astype(jnp.float32)
        t = t_ref[pl.ds(r0, chunk_rows), :].astype(jnp.float32)
        # TODO(synk): for bf16 inputs the diff/abs/square could stay in packed
        # bf16 and widen only at the accumulate (halves VALU work on v6e/v7x).
        d = x - t
        if masked:
            # Select *before* the math: invalid rows get d=0 and x=-1e30, so
            # d*d and |d| contribute 0 and exp(x) underflows to exactly 0.
            base = blk * tile_rows + r0
            row = jax.lax.broadcasted_iota(jnp.int32, (chunk_rows, LANES), 0)
            valid = (base + row) < rows
            d = jnp.where(valid, d, 0.0)
            x = jnp.where(valid, x, -1e30)
        sq = d * d
        ab = jnp.abs(d)
        ex = jnp.exp(x)
        if nsub > 1:
            sq = jnp.sum(sq.reshape(nsub, acc_rows, LANES), axis=0)
            ab = jnp.sum(ab.reshape(nsub, acc_rows, LANES), axis=0)
            ex = jnp.sum(ex.reshape(nsub, acc_rows, LANES), axis=0)
        acc_ref[0] += sq
        acc_ref[1] += ab
        acc_ref[2] += ex

    def fold_block(masked):
        if num_chunks == 1:
            fold_chunk(0, masked)
        else:
            @pl.loop(0, num_chunks)
            def _chunks(k):
                fold_chunk(k, masked)

    if need_mask:
        @pl.when(blk < mask_threshold)       # full interior block: no mask
        def _fast():
            fold_block(False)

        @pl.when(blk >= mask_threshold)      # ragged / redundant edge block
        def _edge():
            fold_block(True)
    else:
        fold_block(False)

    @pl.when(j == steps - 1)
    def _epilogue():
        acc = acc_ref[...]
        if acc_rows > SUBLANES:
            acc = jnp.sum(
                acc.reshape(3, acc_rows // SUBLANES, SUBLANES, LANES), axis=1)
        o_ref[0] = acc


def custom_loss(output, target, a, c, *, num_splits=None,
                max_tile_rows=MAX_TILE_ROWS):
    """Pallas equivalent of CustomLoss.forward. Returns a scalar f32."""
    assert output.shape == target.shape, (output.shape, target.shape)
    n_elems = int(output.size)
    assert n_elems > 0

    flat_x = output.reshape(-1)
    flat_t = target.reshape(-1)

    itemsize = jnp.dtype(output.dtype).itemsize
    row_quantum = SUBLANES * max(1, 4 // itemsize)   # 8 rows f32, 16 rows bf16

    rows = n_elems // LANES                  # full 128-lane rows
    sum_sq = jnp.float32(0.0)
    sum_ab = jnp.float32(0.0)
    sum_ex = jnp.float32(0.0)

    if rows >= row_quantum:
        main = rows * LANES
        # No jnp.pad: multiple-of-128 inputs are a pure reshape; on the rare
        # ragged path only a prefix slice is taken and the <128-element tail
        # is folded in with plain JAX below.
        x2d = (flat_x if main == n_elems else flat_x[:main]).reshape(rows, LANES)
        t2d = (flat_t if main == n_elems else flat_t[:main]).reshape(rows, LANES)

        # Tile geometry: biggest lane-dense block that fits, kept a multiple
        # of the chunk/fold granularity so in-kernel reshapes are exact.
        tile_rows = min(max_tile_rows, rows)
        for q in (CHUNK_ROWS, 64, row_quantum):
            if tile_rows >= q:
                tile_rows -= tile_rows % q
                break
        tile_rows = max(tile_rows, row_quantum)
        chunk_rows = min(CHUNK_ROWS, tile_rows)
        acc_rows = min(64, tile_rows)

        total_blocks = pl.cdiv(rows, tile_rows)
        if num_splits is None:
            # 2 shards the reduction across both TensorCores on v7x; on
            # single-TC chips it is just a cheap sequential split.
            num_splits = 2
        num_splits = max(1, min(num_splits, total_blocks))
        steps = pl.cdiv(total_blocks, num_splits)

        ragged = (rows % tile_rows) != 0
        redundant = num_splits * steps > total_blocks
        need_mask = ragged or redundant
        mask_threshold = total_blocks - 1 if ragged else total_blocks

        if redundant:
            last_block = total_blocks - 1

            def row_block(i, j):
                return (jnp.minimum(i * steps + j, last_block), 0)
        else:
            def row_block(i, j):
                return (i * steps + j, 0)

        kernel = functools.partial(
            _partial_sum_kernel, steps=steps, rows=rows, tile_rows=tile_rows,
            chunk_rows=chunk_rows, mask_threshold=mask_threshold,
            need_mask=need_mask)

        block_bytes = tile_rows * LANES * itemsize
        vmem_limit = int(max(16 << 20, 4 * block_bytes + (4 << 20)))

        partial = pl.pallas_call(
            kernel,
            out_shape=jax.ShapeDtypeStruct(
                (num_splits, 3, SUBLANES, LANES), jnp.float32),
            grid_spec=pltpu.PrefetchScalarGridSpec(
                num_scalar_prefetch=0,
                grid=(num_splits, steps),
                in_specs=[
                    pl.BlockSpec((tile_rows, LANES), row_block),   # output
                    pl.BlockSpec((tile_rows, LANES), row_block),   # target
                ],
                out_specs=pl.BlockSpec((1, 3, SUBLANES, LANES),
                                       lambda i, j: (i, 0, 0, 0)),
                scratch_shapes=[pltpu.VMEM((3, acc_rows, LANES), jnp.float32)],
            ),
            compiler_params=pltpu.CompilerParams(
                dimension_semantics=("parallel", "arbitrary"),
                vmem_limit_bytes=vmem_limit),
        )(x2d, t2d)

        sums = jnp.sum(partial, axis=(0, 2, 3))      # (3,)
        sum_sq, sum_ab, sum_ex = sums[0], sums[1], sums[2]
        tail_start = main
    else:
        # Degenerate tiny input (< one lane-dense row group): pure JAX.
        tail_start = 0

    if tail_start < n_elems:
        tx = flat_x[tail_start:].astype(jnp.float32)
        tt = flat_t[tail_start:].astype(jnp.float32)
        td = tx - tt
        sum_sq = sum_sq + jnp.sum(td * td)
        sum_ab = sum_ab + jnp.sum(jnp.abs(td))
        sum_ex = sum_ex + jnp.sum(jnp.exp(tx))

    inv_n = jnp.float32(1.0 / n_elems)
    l2 = sum_sq * inv_n
    l1 = sum_ab * inv_n
    mean_exp = sum_ex * inv_n
    shrinkage = 1.0 / (1.0 + jnp.exp(jnp.float32(a) * (jnp.float32(c) - l1)))
    return shrinkage * l2 * mean_exp


def _reference_loss(output, target, a, c):
    output = output.astype(jnp.float32)
    target = target.astype(jnp.float32)
    diff = output - target
    l2 = jnp.mean(diff * diff)
    l1 = jnp.mean(jnp.abs(diff))
    shrink = 1.0 / (1.0 + jnp.exp(a * (c - l1)))
    return jnp.mean(shrink * l2 * jnp.exp(output))


if __name__ == "__main__":
    key = jax.random.PRNGKey(0)
    k1, k2, k3, k4, k5, k6 = jax.random.split(key, 6)

    a = 10.0   # config['shrinkage_loss_a']
    c = 0.2    # config['shrinkage_loss_c']

    # 1) Main case: small NCHW regression tensors (matches the PyTorch usage).
    out1 = 0.1 * jax.random.normal(k1, (2, 4, 16, 16), dtype=jnp.float32)
    tgt1 = 0.1 * jax.random.normal(k2, (2, 4, 16, 16), dtype=jnp.float32)
    loss1 = jax.block_until_ready(custom_loss(out1, tgt1, a, c))
    ref1 = _reference_loss(out1, tgt1, a, c)
    assert jnp.allclose(loss1, ref1, rtol=1e-5, atol=1e-6), (loss1, ref1)

    # 2) Ragged element count (1155): exercises the row mask + JAX tail fold.
    out2 = 0.1 * jax.random.normal(k3, (3, 5, 7, 11), dtype=jnp.float32)
    tgt2 = 0.1 * jax.random.normal(k4, (3, 5, 7, 11), dtype=jnp.float32)
    loss2 = jax.block_until_ready(custom_loss(out2, tgt2, a, c))
    ref2 = _reference_loss(out2, tgt2, a, c)
    assert jnp.allclose(loss2, ref2, rtol=1e-5, atol=1e-6), (loss2, ref2)

    # 3) Multi-split / multi-step path (small tile override so the 2-way core
    #    split, block-index clamp and ragged last row-block are exercised).
    out3 = 0.1 * jax.random.normal(k5, (2, 2, 50, 64), dtype=jnp.float32)
    tgt3 = 0.1 * jax.random.normal(k6, (2, 2, 50, 64), dtype=jnp.float32)
    loss3 = jax.block_until_ready(
        custom_loss(out3, tgt3, a, c, num_splits=2, max_tile_rows=16))
    ref3 = _reference_loss(out3, tgt3, a, c)
    assert jnp.allclose(loss3, ref3, rtol=1e-5, atol=1e-6), (loss3, ref3)

    # 4) bf16 inputs pass straight through (upcast happens in-kernel).
    out4 = out1.astype(jnp.bfloat16)
    tgt4 = tgt1.astype(jnp.bfloat16)
    loss4 = jax.block_until_ready(custom_loss(out4, tgt4, a, c))
    ref4 = _reference_loss(out4, tgt4, a, c)
    assert jnp.allclose(loss4, ref4, rtol=1e-3, atol=1e-5), (loss4, ref4)

    print("KERNEL_OK")
</pallas_src>

<mosaic_0001>
module attributes {stable_mosaic.version = 11 : i64} {
  func.func @_partial_sum_kernel(%arg0: i32, %arg1: i32, %arg2: memref<16x128xf32, #tpu.memory_space<vmem>>, %arg3: memref<16x128xf32, #tpu.memory_space<vmem>>, %arg4: memref<1x3x8x128xf32, #tpu.memory_space<vmem>>, %arg5: memref<3x16x128xf32, #tpu.memory_space<vmem>>) attributes {dimension_semantics = [#tpu.dimension_semantics<parallel>, #tpu.dimension_semantics<arbitrary>], iteration_bounds = array<i64: 1, 1>, scalar_prefetch = 0 : i64, scratch_operands = 1 : i64, tpu.core_type = #tpu.core_type<tc>, window_params = [{transform_indices = @transform_0, window_bounds = array<i64: 16, 128>}, {transform_indices = @transform_1, window_bounds = array<i64: 16, 128>}, {transform_indices = @transform_2, window_bounds = array<i64: 1, 3, 8, 128>}]} {
    %c0_i32 = arith.constant 0 : i32
    %0 = arith.cmpi eq, %arg1, %c0_i32 : i32
    %1 = arith.extui %0 : i1 to i32
    %c0_i32_0 = arith.constant 0 : i32
    %2 = arith.cmpi ne, %1, %c0_i32_0 : i32
    scf.if %2 {
      %cst = arith.constant 0.000000e+00 : f32
      %30 = vector.broadcast %cst : f32 to vector<3x16x128xf32>
      %c0_22 = arith.constant 0 : index
      %c0_23 = arith.constant 0 : index
      %c0_24 = arith.constant 0 : index
      %31 = vector.load %arg5[%c0_22, %c0_23, %c0_24] : memref<3x16x128xf32, #tpu.memory_space<vmem>>, vector<3x16x128xf32>
      tpu.vector_store %arg5[%c0_22, %c0_23, %c0_24], %30 {strides = array<i32>} : memref<3x16x128xf32, #tpu.memory_space<vmem>>, vector<3x16x128xf32>,
    } else {
    }
    %c0 = arith.constant 0 : index
    %c0_1 = arith.constant 0 : index
    %3 = vector.load %arg2[%c0, %c0_1] : memref<16x128xf32, #tpu.memory_space<vmem>>, vector<16x128xf32>
    %c0_2 = arith.constant 0 : index
    %c0_3 = arith.constant 0 : index
    %4 = vector.load %arg3[%c0_2, %c0_3] : memref<16x128xf32, #tpu.memory_space<vmem>>, vector<16x128xf32>
    %5 = arith.subf %3, %4 : vector<16x128xf32>
    %6 = arith.mulf %5, %5 : vector<16x128xf32>
    %7 = math.absf %5 : vector<16x128xf32>
    %8 = math.exp %3 : vector<16x128xf32>
    %c0_4 = arith.constant 0 : index
    %c0_5 = arith.constant 0 : index
    %c0_6 = arith.constant 0 : index
    %9 = vector.load %arg5[%c0_4, %c0_5, %c0_6] : memref<3x16x128xf32, #tpu.memory_space<vmem>>, vector<1x16x128xf32>
    %10 = vector.shape_cast %9 : vector<1x16x128xf32> to vector<16x128xf32>
    %11 = arith.addf %10, %6 : vector<16x128xf32>
    %c0_7 = arith.constant 0 : index
    %c0_8 = arith.constant 0 : index
    %c0_9 = arith.constant 0 : index
    %12 = vector.load %arg5[%c0_7, %c0_8, %c0_9] : memref<3x16x128xf32, #tpu.memory_space<vmem>>, vector<1x16x128xf32>
    %13 = vector.shape_cast %12 : vector<1x16x128xf32> to vector<16x128xf32>
    %14 = vector.shape_cast %11 : vector<16x128xf32> to vector<1x16x128xf32>
    tpu.vector_store %arg5[%c0_7, %c0_8, %c0_9], %14 {strides = array<i32>} : memref<3x16x128xf32, #tpu.memory_space<vmem>>, vector<1x16x128xf32>,
    %c1 = arith.constant 1 : index
    %c0_10 = arith.constant 0 : index
    %c0_11 = arith.constant 0 : index
    %15 = vector.load %arg5[%c1, %c0_10, %c0_11] : memref<3x16x128xf32, #tpu.memory_space<vmem>>, vector<1x16x128xf32>
    %16 = vector.shape_cast %15 : vector<1x16x128xf32> to vector<16x128xf32>
    %17 = arith.addf %16, %7 : vector<16x128xf32>
    %c1_12 = arith.constant 1 : index
    %c0_13 = arith.constant 0 : index
    %c0_14 = arith.constant 0 : index
    %18 = vector.load %arg5[%c1_12, %c0_13, %c0_14] : memref<3x16x128xf32, #tpu.memory_space<vmem>>, vector<1x16x128xf32>
    %19 = vector.shape_cast %18 : vector<1x16x128xf32> to vector<16x128xf32>
    %20 = vector.shape_cast %17 : vector<16x128xf32> to vector<1x16x128xf32>
    tpu.vector_store %arg5[%c1_12, %c0_13, %c0_14], %20 {strides = array<i32>} : memref<3x16x128xf32, #tpu.memory_space<vmem>>, vector<1x16x128xf32>,
    %c2 = arith.constant 2 : index
    %c0_15 = arith.constant 0 : index
    %c0_16 = arith.constant 0 : index
    %21 = vector.load %arg5[%c2, %c0_15, %c0_16] : memref<3x16x128xf32, #tpu.memory_space<vmem>>, vector<1x16x128xf32>
    %22 = vector.shape_cast %21 : vector<1x16x128xf32> to vector<16x128xf32>
    %23 = arith.addf %22, %8 : vector<16x128xf32>
    %c2_17 = arith.constant 2 : index
    %c0_18 = arith.constant 0 : index
    %c0_19 = arith.constant 0 : index
    %24 = vector.load %arg5[%c2_17, %c0_18, %c0_19] : memref<3x16x128xf32, #tpu.memory_space<vmem>>, vector<1x16x128xf32>
    %25 = vector.shape_cast %24 : vector<1x16x128xf32> to vector<16x128xf32>
    %26 = vector.shape_cast %23 : vector<16x128xf32> to vector<1x16x128xf32>
    tpu.vector_store %arg5[%c2_17, %c0_18, %c0_19], %26 {strides = array<i32>} : memref<3x16x128xf32, #tpu.memory_space<vmem>>, vector<1x16x128xf32>,
    %c0_i32_20 = arith.constant 0 : i32
    %27 = arith.cmpi eq, %arg1, %c0_i32_20 : i32
    %28 = arith.extui %27 : i1 to i32
    %c0_i32_21 = arith.constant 0 : i32
    %29 = arith.cmpi ne, %28, %c0_i32_21 : i32
    scf.if %29 {
      %c0_22 = arith.constant 0 : index
      %c0_23 = arith.constant 0 : index
      %c0_24 = arith.constant 0 : index
      %30 = vector.load %arg5[%c0_22, %c0_23, %c0_24] : memref<3x16x128xf32, #tpu.memory_space<vmem>>, vector<3x16x128xf32>
      %31 = vector.shape_cast %30 : vector<3x16x128xf32> to vector<3x2x8x128xf32>
      %cst = arith.constant dense<0.000000e+00> : vector<3x8x128xf32>
      %32 = vector.multi_reduction <add>, %31, %cst [1] : vector<3x2x8x128xf32> to vector<3x8x128xf32>
      %c0_25 = arith.constant 0 : index
      %c0_26 = arith.constant 0 : index
      %c0_27 = arith.constant 0 : index
      %c0_28 = arith.constant 0 : index
      %33 = vector.load %arg4[%c0_25, %c0_26, %c0_27, %c0_28] : memref<1x3x8x128xf32, #tpu.memory_space<vmem>>, vector<1x3x8x128xf32>
      %34 = vector.shape_cast %33 : vector<1x3x8x128xf32> to vector<3x8x128xf32>
      %35 = vector.shape_cast %32 : vector<3x8x128xf32> to vector<1x3x8x128xf32>
      tpu.vector_store %arg4[%c0_25, %c0_26, %c0_27, %c0_28], %35 {strides = array<i32>} : memref<1x3x8x128xf32, #tpu.memory_space<vmem>>, vector<1x3x8x128xf32>,
    } else {
    }
    return
  }
  func.func @transform_0(%arg0: i32, %arg1: i32) -> (i32, i32) {
    %c1_i32 = arith.constant 1 : i32
    %0 = arith.muli %arg0, %c1_i32 : i32
    %1 = arith.addi %0, %arg1 : i32
    %c0_i32 = arith.constant 0 : i32
    %c0_i32_0 = arith.constant 0 : i32
    return %1, %c0_i32 : i32, i32
  }
  func.func @transform_1(%arg0: i32, %arg1: i32) -> (i32, i32) {
    %c1_i32 = arith.constant 1 : i32
    %0 = arith.muli %arg0, %c1_i32 : i32
    %1 = arith.addi %0, %arg1 : i32
    %c0_i32 = arith.constant 0 : i32
    %c0_i32_0 = arith.constant 0 : i32
    return %1, %c0_i32 : i32, i32
  }
  func.func @transform_2(%arg0: i32, %arg1: i32) -> (i32, i32, i32, i32) {
    %c0_i32 = arith.constant 0 : i32
    %c0_i32_0 = arith.constant 0 : i32
    %c0_i32_1 = arith.constant 0 : i32
    %c0_i32_2 = arith.constant 0 : i32
    return %arg0, %c0_i32, %c0_i32_0, %c0_i32_1 : i32, i32, i32, i32
  }
}

</mosaic_0001>

<llo_original>
// kernel: tpu_custom_call.1
$region0: #{tpu_custom_call.1}
  #allocation0 [shape = 'u32[]', space=smem, size = 0x4, offset = 0x4, fixed_abs, tag = 'smem constant byte address 0x4 - core index']
  #allocation1 [shape = 'u32[144,128]{1,0:T(1,128)}', space=vmem, size = 0x12000, scoped, tag = 'internal scratch']
  #allocation2 [shape = 'f32[3,16,128]{2,1,0:T(8,128)}', space=vmem, size = 0x6000, scoped, tag = 'scratch operand']
  %s0 = inlined_call_operand.hbm [shape: f32[16,128], index: 0, kind: input, shape index: {}]
  %s1 = inlined_call_operand.hbm [shape: f32[16,128], index: 1, kind: input, shape index: {}]
  %s2 = inlined_call_operand.hbm [shape: f32[1,3,8,128], index: 2, kind: output, shape index: {}]
  %s3 = sld [smem:[#allocation0]]
  $region34: #{tpu_custom_call.1} parent=0
    _
  %s5 = ssub.s32 1, %s3
  %s6 = scalar_select 0, %s5, %s3
  $region1: #{tpu_custom_call.1} parent=0
    #allocation3 [shape = 'u8[8192]{0}', space=vmem, size = 0x2000, scoped, tag = 'input window, operand 0, single buffered']
    #allocation4 [shape = 's32[1]{0}', space=sflag, size = 0x4, scoped, tag = 'scoped memory for tpu_custom_call.1']
    #allocation5 [shape = 's32[1]{0}', space=sflag, size = 0x4, scoped, tag = 'scoped memory for tpu_custom_call.1']
    #allocation6 [shape = 'u8[8192]{0}', space=vmem, size = 0x2000, scoped, tag = 'input window, operand 1, single buffered']
    #allocation7 [shape = 's32[1]{0}', space=sflag, size = 0x4, scoped, tag = 'scoped memory for tpu_custom_call.1']
    #allocation8 [shape = 'u8[12288]{0}', space=vmem, size = 0x3000, scoped, tag = 'output window, operand 0, single buffered']
    %7 = vsyncpa [#allocation4], 0
    %8 = vsyncpa [#allocation7], 0
    %9 = vsyncpa [#allocation5], 0
    // Predicated region
    $region2: #{tpu_custom_call.1} parent=1 // pred_check
      _
    $region3: #{tpu_custom_call.1} parent=1 // pred_check_branch
      %11 = sbr.rel (0) target = $region5
    $region4: #{tpu_custom_call.1} parent=1 // pred_region
      %s12 = sadd.s32 0, 0
      %s13 = smul.u32 2, %s12
      %s15 = ssub.s32 256, 256
      %16 = vsyncadd [#allocation4], %s15
      %s17 = smul.addr %s13, 128
      %s18 = scalar_lea.hbm %s0, %s17
      %s19 = sshll.u32 [#allocation3], 4
      %s20 = int_to_ptr.vmem [resolvable:$true] %s19
      %25 = dma.hbm_to_vmem [thread:$0]  %s18, 256, %s20, [#allocation4], 128, 128, 8
    $region5: #{tpu_custom_call.1} parent=1 // pred_fallthru
      _
    // Predicated region
    $region6: #{tpu_custom_call.1} parent=1 // pred_check
      _
    $region7: #{tpu_custom_call.1} parent=1 // pred_check_branch
      %27 = sbr.rel (0) target = $region9
    $region8: #{tpu_custom_call.1} parent=1 // pred_region
      %s28 = sadd.s32 0, 0
      %s29 = smul.u32 2, %s28
      %s31 = ssub.s32 256, 256
      %32 = vsyncadd [#allocation7], %s31
      %s33 = smul.addr %s29, 128
      %s34 = scalar_lea.hbm %s1, %s33
      %s35 = sshll.u32 [#allocation6], 4
      %s36 = int_to_ptr.vmem [resolvable:$true] %s35
      %41 = dma.hbm_to_vmem [thread:$0]  %s34, 256, %s36, [#allocation7], 128, 128, 8
    $region9: #{tpu_custom_call.1} parent=1 // pred_fallthru
      _
    // Predicated region
    $region10: #{tpu_custom_call.1} parent=1 // pred_check
      _
    $region11: #{tpu_custom_call.1} parent=1 // pred_check_branch
      %43 = sbr.rel (0) target = $region13
    $region12: #{tpu_custom_call.1} parent=1 // pred_region
      %44 = dma.done [#allocation4], 256
    $region13: #{tpu_custom_call.1} parent=1 // pred_fallthru
      _
    // Predicated region
    $region14: #{tpu_custom_call.1} parent=1 // pred_check
      _
    $region15: #{tpu_custom_call.1} parent=1 // pred_check_branch
      %46 = sbr.rel (0) target = $region17
    $region16: #{tpu_custom_call.1} parent=1 // pred_region
      %47 = dma.done [#allocation7], 256
    $region17: #{tpu_custom_call.1} parent=1 // pred_fallthru
      _
    %s48 = sadd.s32 0, 0
    %s49 = smul.u32 2, %s48
    %s50 = sadd.s32 0, 0
    %s51 = smul.u32 2, %s50
    %p52 = scmp.eq.s32.totalorder 0, 0
    // Predicated region
    $region18: #{tpu_custom_call.1} parent=1 // pred_check
      %p53 = pneg %p52
    $region19: #{tpu_custom_call.1} parent=1 // pred_check_branch
      %55 = sbr.rel (%p53) target = $region21
    $region20: #{tpu_custom_call.1} parent=1 // pred_region
      %56 = vst [vmem:[#allocation2] sm:$0xff] 0.0
      %57 = vst [vmem:[#allocation2 + $0x8] sm:$0xff] 0.0
      %58 = vst [vmem:[#allocation2 + $0x10] sm:$0xff] 0.0
      %59 = vst [vmem:[#allocation2 + $0x18] sm:$0xff] 0.0
      %60 = vst [vmem:[#allocation2 + $0x20] sm:$0xff] 0.0
      %61 = vst [vmem:[#allocation2 + $0x28] sm:$0xff] 0.0
    $region21: #{tpu_custom_call.1} parent=1 // pred_fallthru
      _
    %v62 = vld [vmem:[#allocation3] sm:$0xff]
    %v63 = vld [vmem:[#allocation3 + $0x8] sm:$0xff]
    %v64 = vld [vmem:[#allocation6] sm:$0xff]
    %v65 = vld [vmem:[#allocation6 + $0x8] sm:$0xff]
    %v66 = vsub.f32 %v62, %v64
    %v67 = vsub.f32 %v63, %v65
    %v68 = vmul.f32 %v66, %v66
    %v69 = vmul.f32 %v67, %v67
    %v70 = vand.u32 2147483647, %v66
    %v71 = vand.u32 2147483647, %v67
    %v72 = vmul.f32 %v62, 1.442695
    %v73 = vpow.pop %v72
    %v74 = vmul.f32 %v63, 1.442695
    %v75 = vpow.pop %v74
    %v76 = vld [vmem:[#allocation2] sm:$0xff]
    %v77 = vld [vmem:[#allocation2 + $0x8] sm:$0xff]
    %v78 = vadd.f32 %v76, %v68
    %v79 = vadd.f32 %v77, %v69
    %80 = vst [vmem:[#allocation2] sm:$0xff] %v78
    %81 = vst [vmem:[#allocation2 + $0x8] sm:$0xff] %v79
    %s82 = scalar_lea.vmem [#allocation2], 16
    %v83 = vld [vmem:[%s82] sm:$0xff]
    %v84 = vld [vmem:[%s82 + $0x8] sm:$0xff]
    %v85 = vadd.f32 %v83, %v70
    %v86 = vadd.f32 %v84, %v71
    %87 = vst [vmem:[%s82] sm:$0xff] %v85
    %88 = vst [vmem:[%s82 + $0x8] sm:$0xff] %v86
    %s89 = scalar_lea.vmem [#allocation2], 32
    %v90 = vld [vmem:[%s89] sm:$0xff]
    %v91 = vld [vmem:[%s89 + $0x8] sm:$0xff]
    %v92 = vadd.f32 %v90, %v73
    %v93 = vadd.f32 %v91, %v75
    %94 = vst [vmem:[%s89] sm:$0xff] %v92
    %95 = vst [vmem:[%s89 + $0x8] sm:$0xff] %v93
    // Predicated region
    $region22: #{tpu_custom_call.1} parent=1 // pred_check
      %p96 = pneg %p52
    $region23: #{tpu_custom_call.1} parent=1 // pred_check_branch
      %98 = sbr.rel (%p96) target = $region25
    $region24: #{tpu_custom_call.1} parent=1 // pred_region
      %v99 = vld [vmem:[#allocation2] sm:$0xff]
      %v100 = vld [vmem:[#allocation2 + $0x8] sm:$0xff]
      %v101 = vld [vmem:[#allocation2 + $0x10] sm:$0xff]
      %v102 = vld [vmem:[#allocation2 + $0x18] sm:$0xff]
      %v103 = vld [vmem:[#allocation2 + $0x20] sm:$0xff]
      %v104 = vld [vmem:[#allocation2 + $0x28] sm:$0xff]
      %v105 = vadd.f32 %v99, %v100
      %v106 = vadd.f32 %v101, %v102
      %v107 = vadd.f32 %v103, %v104
      %108 = vst [vmem:[#allocation8] sm:$0xff] %v105
      %109 = vst [vmem:[#allocation8 + $0x8] sm:$0xff] %v106
      %110 = vst [vmem:[#allocation8 + $0x10] sm:$0xff] %v107
    $region25: #{tpu_custom_call.1} parent=1 // pred_fallthru
      _
    // Predicated region
    $region26: #{tpu_custom_call.1} parent=1 // pred_check
      _
    $region27: #{tpu_custom_call.1} parent=1 // pred_check_branch
      %112 = sbr.rel (0) target = $region29
    $region28: #{tpu_custom_call.1} parent=1 // pred_region
      %s114 = ssub.s32 384, 384
      %115 = vsyncadd [#allocation5], %s114
      %s116 = sshll.u32 [#allocation8], 4
      %s117 = int_to_ptr.vmem [resolvable:$true] %s116
      %122 = dma.vmem_to_hbm [thread:$0]  %s117, 384, %s2, [#allocation5], 128, 128, 8
    $region29: #{tpu_custom_call.1} parent=1 // pred_fallthru
      _
    // Predicated region
    $region30: #{tpu_custom_call.1} parent=1 // pred_check
      _
    $region31: #{tpu_custom_call.1} parent=1 // pred_check_branch
      %124 = sbr.rel (0) target = $region33
    $region32: #{tpu_custom_call.1} parent=1 // pred_region
      %125 = dma.done [#allocation5], 384
    $region33: #{tpu_custom_call.1} parent=1 // pred_fallthru
      _
    %126 = vsyncpa [#allocation4], 1
    %127 = vsyncpa [#allocation7], 1
    %128 = vsyncpa [#allocation5], 1

</llo_original>
